<compile_context>
chip_gen: v6e
topology: v6e:2x2x1
jax: 0.10.0
libtpu: 0.0.40
codegen_flags: <defaults>
</compile_context>

<pallas_src>
import functools

import jax
import jax.numpy as jnp
from jax.experimental import pallas as pl
from jax.experimental.pallas import tpu as pltpu

DICE_EPS = 1e-5
FOCAL_EPS = 1e-8
IGNORE_INDEX = 255.0
GAMMA = 2  # hard-coded as an explicit multiply inside the kernel (no pow)

LANES = 128
SUBLANES = 8
MAX_TILE_ROWS = 8192  # 8192*128*4B = 4 MiB / input tile; x2 inputs x2 buffers = 16 MiB


def _round_up(x, m):
    return ((x + m - 1) // m) * m


def _focal_dice_partials_kernel(idx_ref, pred_ref, tgt_ref, out_ref, *,
                                tile_rows, hw, need_mask, num_tiles):
    """Grid = (active_channel, batch, spatial_tile).

    idx_ref : SMEM (C_active,) int32 -- active channel ids (scalar prefetch,
                                        consumed only by the index_maps)
    pred_ref: VMEM (tile_rows, 128)  -- logits tile of one (image, channel)
    tgt_ref : VMEM (tile_rows, 128)  -- target tile of one (image, channel)
    out_ref : VMEM (5, 8, 128) f32   -- per-(channel, image) partial sums,
                                        resident across the spatial axis:
                                        [inter, sum_sig, sum_tgt, focal_sum, n_valid]
    """
    del idx_ref  # used only inside the index_maps
    j = pl.program_id(2)

    @pl.when(j == 0)
    def _():
        out_ref[...] = jnp.zeros_like(out_ref)

    pred = pred_ref[...].astype(jnp.float32)
    tgt = tgt_ref[...].astype(jnp.float32)

    # sigmoid on the EUP slot: exp + approx reciprocal; shared by dice & focal.
    sig = pl.reciprocal(1.0 + jnp.exp(-pred), approx=True)

    # One-hot-row (8, tile_rows) matrix: jnp.dot(fold_mat, x) puts the per-lane
    # column sums of x into row 0 of an (8, 128) tile (rows 1..7 are zero).
    # This moves the per-tile row reduction off the saturated VALU slot and
    # onto the otherwise idle MXU.
    fold_mat = (jax.lax.broadcasted_iota(jnp.int32, (SUBLANES, tile_rows), 0)
                == 0).astype(jnp.float32)

    def fold(x):
        return jnp.dot(fold_mat, x, preferred_element_type=jnp.float32)

    def accumulate(mask_tail):
        sig_m, tgt_m = sig, tgt
        valid = tgt != IGNORE_INDEX
        if mask_tail:
            # Element index inside this (image, channel) slab; int32 is fine
            # for any realistic H*W (< 2**31 elements per image per channel).
            row = jax.lax.broadcasted_iota(jnp.int32, (tile_rows, LANES), 0)
            lane = jax.lax.broadcasted_iota(jnp.int32, (tile_rows, LANES), 1)
            in_bounds = (j * tile_rows + row) * LANES + lane < hw
            sig_m = jnp.where(in_bounds, sig, 0.0)
            tgt_m = jnp.where(in_bounds, tgt, 0.0)
            valid = valid & in_bounds

        # ---- Dice partials (padding excluded; 255s included, like the reference)
        inter = sig_m * tgt_m

        # ---- Focal partials (gamma=2, ignore_index=255) ----------------------
        # Single clip of pt (within ~1e-7 of the reference's double clip);
        # elements with tgt==255 give an out-of-range pt pre-clip but they are
        # masked out by `valid` anyway.
        pt = jnp.clip((1.0 - tgt) * (1.0 - sig) + tgt * sig,
                      FOCAL_EPS, 1.0 - FOCAL_EPS)
        one_m_pt = 1.0 - pt
        fe = jnp.where(valid, -(one_m_pt * one_m_pt) * jnp.log(pt), 0.0)
        n_valid = valid.astype(jnp.float32)

        out_ref[0] += fold(inter)
        out_ref[1] += fold(sig_m)
        out_ref[2] += fold(tgt_m)
        out_ref[3] += fold(fe)
        out_ref[4] += fold(n_valid)

    if not need_mask:
        accumulate(False)          # fast path: no iota / compare / select at all
    elif num_tiles == 1:
        accumulate(True)
    else:
        last = pl.num_programs(2) - 1

        @pl.when(j == last)
        def _():
            accumulate(True)       # only the last spatial tile pays for the mask

        @pl.when(j != last)
        def _():
            accumulate(False)


def focal_dice_loss(outputs, targets,
                    weights=(1.0, 0.0, 1.0, 1.0, 0.0, 1.0),
                    coef_focal=1.0, coef_dice=1.0):
    """outputs, targets: (N, C, H, W), C == len(weights). Returns scalar f32.

    targets may be passed in bf16 ({0,1,255} are exact) to halve that HBM
    stream on bandwidth-bound parts (v5e); the kernel upcasts to f32.
    """
    N, C, H, W = outputs.shape
    assert targets.shape == outputs.shape and C == len(weights)

    # Skip zero-weight channels entirely (no DMA, no compute).
    active = [i for i, w in enumerate(weights) if float(w) != 0.0]
    if not active:
        return jnp.float32(0.0)
    c_act = len(active)
    hw = H * W

    # Lane-dense layout per (image, channel): (N, C, rows, 128).
    rows = _round_up(pl.cdiv(hw, LANES), SUBLANES)
    lane_pad = rows * LANES - hw

    if lane_pad == 0:
        # Free, layout-preserving minor-dim split: no transpose, no copy.
        pred4 = outputs.reshape(N, C, rows, LANES)
        tgt4 = targets.reshape(N, C, rows, LANES)
    else:
        # Ragged H*W (not a multiple of 1024): pad the flattened spatial axis.
        # Only small / odd shapes hit this copy; padded elements are excluded
        # in-kernel by the tail mask.
        def pad4(x):
            x = x.reshape(N, C, hw)
            return jnp.pad(x, ((0, 0), (0, 0), (0, lane_pad))).reshape(
                N, C, rows, LANES)
        pred4 = pad4(outputs)
        tgt4 = pad4(targets)

    tile_rows = min(MAX_TILE_ROWS, rows)
    num_tiles = pl.cdiv(rows, tile_rows)
    need_mask = (lane_pad != 0) or (rows % tile_rows != 0)

    chan_idx = jnp.asarray(active, dtype=jnp.int32)

    kernel = functools.partial(_focal_dice_partials_kernel,
                               tile_rows=tile_rows, hw=hw,
                               need_mask=need_mask, num_tiles=num_tiles)

    partials = pl.pallas_call(
        kernel,
        out_shape=jax.ShapeDtypeStruct((c_act, N, 5, SUBLANES, LANES),
                                       jnp.float32),
        grid_spec=pltpu.PrefetchScalarGridSpec(
            num_scalar_prefetch=1,               # active-channel ids -> SMEM
            grid=(c_act, N, num_tiles),          # reduction (spatial) axis last
            in_specs=[
                pl.BlockSpec((None, None, tile_rows, LANES),
                             lambda c, n, j, idx: (n, idx[c], j, 0)),
                pl.BlockSpec((None, None, tile_rows, LANES),
                             lambda c, n, j, idx: (n, idx[c], j, 0)),
            ],
            out_specs=pl.BlockSpec((None, None, 5, SUBLANES, LANES),
                                   lambda c, n, j, idx: (c, n, 0, 0, 0)),
        ),
        compiler_params=pltpu.CompilerParams(
            dimension_semantics=("parallel", "parallel", "arbitrary"),
            vmem_limit_bytes=32 * 1024 * 1024,   # 16 MiB pipeline; v7x-safe
        ),
    )(chan_idx, pred4, tgt4)

    # Final combine in JAX (tiny): (c_act, N, 5, 8, 128) -> (c_act, 5).
    sums = jnp.sum(partials, axis=(1, 3, 4))
    inter, s_sig, s_tgt, f_sum, n_val = (sums[:, k] for k in range(5))
    dice = 1.0 - (2.0 * inter + DICE_EPS) / (s_sig + s_tgt + DICE_EPS)
    # Guard the degenerate all-ignored channel (the reference yields NaN there).
    focal = jnp.where(n_val > 0, f_sum / jnp.maximum(n_val, 1.0), 0.0)
    w_act = jnp.asarray([float(weights[i]) for i in active], dtype=jnp.float32)
    return jnp.sum(w_act * (coef_dice * dice + coef_focal * focal))


# ---------------------------- pure-JAX reference -----------------------------
def _reference(outputs, targets,
               weights=(1.0, 0.0, 1.0, 1.0, 0.0, 1.0),
               coef_focal=1.0, coef_dice=1.0):
    def dice(p, t):
        p = jax.nn.sigmoid(p).reshape(-1)
        t = t.reshape(-1).astype(jnp.float32)
        inter = jnp.sum(p * t)
        union = jnp.sum(p) + jnp.sum(t) + DICE_EPS
        return 1.0 - (2.0 * inter + DICE_EPS) / union

    def focal(p, t):
        p = jax.nn.sigmoid(p).reshape(-1)
        t = t.reshape(-1)
        valid = t != IGNORE_INDEX
        o = jnp.clip(p, FOCAL_EPS, 1.0 - FOCAL_EPS)
        tt = jnp.clip(t.astype(jnp.float32), FOCAL_EPS, 1.0 - FOCAL_EPS)
        pt = (1.0 - tt) * (1.0 - o) + tt * o
        fe = -((1.0 - pt) ** GAMMA) * jnp.log(pt)
        return jnp.sum(jnp.where(valid, fe, 0.0)) / jnp.sum(valid)

    loss = 0.0
    for i in range(len(weights)):
        p, t = outputs[:, i], targets[:, i]
        loss += weights[i] * (coef_dice * dice(p, t) + coef_focal * focal(p, t))
    return loss


if __name__ == "__main__":
    key = jax.random.PRNGKey(0)
    k1, k2, k3, k4 = jax.random.split(key, 4)
    C = 6

    # Case 1: H*W multiple of 1024 -> copy-free fast path, no tail mask;
    # also exercises ignore_index=255 handling in the focal term.
    N1, H1, W1 = 2, 32, 32
    out1 = jax.random.normal(k1, (N1, C, H1, W1), dtype=jnp.float32)
    tgt1 = (jax.random.uniform(k2, (N1, C, H1, W1)) > 0.5).astype(jnp.float32)
    tgt1 = tgt1.at[:, :, :2, :].set(IGNORE_INDEX)

    # Case 2: small ragged shape -> padded slab + masked tail tile.
    N2, H2, W2 = 2, 16, 16
    out2 = jax.random.normal(k3, (N2, C, H2, W2), dtype=jnp.float32)
    tgt2 = (jax.random.uniform(k4, (N2, C, H2, W2)) > 0.5).astype(jnp.float32)

    for o, t in ((out1, tgt1), (out2, tgt2)):
        loss = jax.block_until_ready(focal_dice_loss(o, t))
        ref = jax.block_until_ready(_reference(o, t))
        # Approx EUP reciprocal + single-clip pt deviate from the reference at
        # the ~1e-7/element level; 5e-4 relative on the scalar loss is ample.
        assert jnp.allclose(loss, ref, rtol=5e-4, atol=1e-5), (loss, ref)

    print("KERNEL_OK")
</pallas_src>

<mosaic_0001>
module attributes {stable_mosaic.version = 11 : i64} {
  func.func @_focal_dice_partials_kernel(%arg0: i32, %arg1: i32, %arg2: i32, %arg3: memref<4xi32, #tpu.memory_space<smem>>, %arg4: memref<1x1x8x128xf32, #tpu.memory_space<vmem>>, %arg5: memref<1x1x8x128xf32, #tpu.memory_space<vmem>>, %arg6: memref<1x1x5x8x128xf32, #tpu.memory_space<vmem>>) attributes {dimension_semantics = [#tpu.dimension_semantics<parallel>, #tpu.dimension_semantics<parallel>, #tpu.dimension_semantics<arbitrary>], iteration_bounds = array<i64: 4, 2, 1>, scalar_prefetch = 1 : i64, scratch_operands = 0 : i64, tpu.core_type = #tpu.core_type<tc>, window_params = [{transform_indices = @transform_0, window_bounds = array<i64: 1, 1, 8, 128>}, {transform_indices = @transform_1, window_bounds = array<i64: 1, 1, 8, 128>}, {transform_indices = @transform_2, window_bounds = array<i64: 1, 1, 5, 8, 128>}]} {
    %c0_i32 = arith.constant 0 : i32
    %0 = arith.cmpi eq, %arg2, %c0_i32 : i32
    %1 = arith.extui %0 : i1 to i32
    %c0_i32_0 = arith.constant 0 : i32
    %2 = arith.cmpi ne, %1, %c0_i32_0 : i32
    scf.if %2 {
      %cst_69 = arith.constant 0.000000e+00 : f32
      %78 = vector.broadcast %cst_69 : f32 to vector<5x8x128xf32>
      %c0_70 = arith.constant 0 : index
      %c0_71 = arith.constant 0 : index
      %c0_72 = arith.constant 0 : index
      %c0_73 = arith.constant 0 : index
      %c0_74 = arith.constant 0 : index
      %79 = vector.load %arg6[%c0_70, %c0_71, %c0_72, %c0_73, %c0_74] : memref<1x1x5x8x128xf32, #tpu.memory_space<vmem>>, vector<1x1x5x8x128xf32>
      %80 = vector.shape_cast %79 : vector<1x1x5x8x128xf32> to vector<5x8x128xf32>
      %81 = vector.shape_cast %78 : vector<5x8x128xf32> to vector<1x1x5x8x128xf32>
      tpu.vector_store %arg6[%c0_70, %c0_71, %c0_72, %c0_73, %c0_74], %81 {strides = array<i32>} : memref<1x1x5x8x128xf32, #tpu.memory_space<vmem>>, vector<1x1x5x8x128xf32>,
    } else {
    }
    %c0 = arith.constant 0 : index
    %c0_1 = arith.constant 0 : index
    %c0_2 = arith.constant 0 : index
    %c0_3 = arith.constant 0 : index
    %3 = vector.load %arg4[%c0, %c0_1, %c0_2, %c0_3] : memref<1x1x8x128xf32, #tpu.memory_space<vmem>>, vector<1x1x8x128xf32>
    %4 = vector.shape_cast %3 : vector<1x1x8x128xf32> to vector<8x128xf32>
    %c0_4 = arith.constant 0 : index
    %c0_5 = arith.constant 0 : index
    %c0_6 = arith.constant 0 : index
    %c0_7 = arith.constant 0 : index
    %5 = vector.load %arg5[%c0_4, %c0_5, %c0_6, %c0_7] : memref<1x1x8x128xf32, #tpu.memory_space<vmem>>, vector<1x1x8x128xf32>
    %6 = vector.shape_cast %5 : vector<1x1x8x128xf32> to vector<8x128xf32>
    %cst = arith.constant 0.000000e+00 : f32
    %7 = vector.broadcast %cst : f32 to vector<8x128xf32>
    %8 = arith.subf %7, %4 : vector<8x128xf32>
    %9 = math.exp %8 : vector<8x128xf32>
    %cst_8 = arith.constant 1.000000e+00 : f32
    %10 = vector.broadcast %cst_8 : f32 to vector<8x128xf32>
    %11 = arith.addf %10, %9 : vector<8x128xf32>
    %12 = tpu.reciprocal %11 {approx = true} : vector<8x128xf32> -> vector<8x128xf32>
    %13 = tpu.iota {dimensions = array<i32: 0>} : vector<8x8xi32>
    %c0_i32_9 = arith.constant 0 : i32
    %14 = vector.broadcast %c0_i32_9 : i32 to vector<8x8xi32>
    %15 = arith.cmpi eq, %13, %14 : vector<8x8xi32>
    %16 = arith.extui %15 : vector<8x8xi1> to vector<8x8xi32>
    %17 = arith.sitofp %16 : vector<8x8xi32> to vector<8x8xf32>
    %cst_10 = arith.constant 2.550000e+02 : f32
    %18 = vector.broadcast %cst_10 : f32 to vector<8x128xf32>
    %19 = arith.cmpf one, %6, %18 : vector<8x128xf32>
    %20 = arith.mulf %12, %6 : vector<8x128xf32>
    %cst_11 = arith.constant 1.000000e+00 : f32
    %21 = vector.broadcast %cst_11 : f32 to vector<8x128xf32>
    %22 = arith.subf %21, %6 : vector<8x128xf32>
    %cst_12 = arith.constant 1.000000e+00 : f32
    %23 = vector.broadcast %cst_12 : f32 to vector<8x128xf32>
    %24 = arith.subf %23, %12 : vector<8x128xf32>
    %25 = arith.mulf %22, %24 : vector<8x128xf32>
    %26 = arith.mulf %6, %12 : vector<8x128xf32>
    %27 = arith.addf %25, %26 : vector<8x128xf32>
    %cst_13 = arith.constant 9.99999993E-9 : f32
    %cst_14 = arith.constant 1.000000e+00 : f32
    %28 = vector.broadcast %cst_13 : f32 to vector<8x128xf32>
    %29 = arith.maximumf %28, %27 : vector<8x128xf32>
    %30 = vector.broadcast %cst_14 : f32 to vector<8x128xf32>
    %31 = arith.minimumf %30, %29 : vector<8x128xf32>
    %cst_15 = arith.constant 1.000000e+00 : f32
    %32 = vector.broadcast %cst_15 : f32 to vector<8x128xf32>
    %33 = arith.subf %32, %31 : vector<8x128xf32>
    %34 = arith.mulf %33, %33 : vector<8x128xf32>
    %cst_16 = arith.constant 0.000000e+00 : f32
    %35 = vector.broadcast %cst_16 : f32 to vector<8x128xf32>
    %36 = arith.subf %35, %34 : vector<8x128xf32>
    %37 = math.log %31 : vector<8x128xf32>
    %38 = arith.mulf %36, %37 : vector<8x128xf32>
    %cst_17 = arith.constant 0.000000e+00 : f32
    %39 = vector.broadcast %cst_17 : f32 to vector<8x128xf32>
    %40 = arith.select %19, %38, %39 : vector<8x128xi1>, vector<8x128xf32>
    %41 = arith.extui %19 : vector<8x128xi1> to vector<8x128xi32>
    %42 = arith.sitofp %41 : vector<8x128xi32> to vector<8x128xf32>
    %c0_18 = arith.constant 0 : index
    %c0_19 = arith.constant 0 : index
    %c0_20 = arith.constant 0 : index
    %c0_21 = arith.constant 0 : index
    %c0_22 = arith.constant 0 : index
    %43 = vector.load %arg6[%c0_18, %c0_19, %c0_20, %c0_21, %c0_22] : memref<1x1x5x8x128xf32, #tpu.memory_space<vmem>>, vector<1x1x1x8x128xf32>
    %44 = vector.shape_cast %43 : vector<1x1x1x8x128xf32> to vector<8x128xf32>
    %cst_23 = arith.constant dense<0.000000e+00> : vector<8x128xf32>
    %45 = tpu.matmul %17, %20, %cst_23 {dimension_numbers = #tpu.dot_dimension_numbers<[1], [0], [0], [1], [0, 0, 1, 1], [], []>} : vector<8x8xf32>, vector<8x128xf32>, vector<8x128xf32> -> vector<8x128xf32>
    %46 = arith.addf %44, %45 : vector<8x128xf32>
    %c0_24 = arith.constant 0 : index
    %c0_25 = arith.constant 0 : index
    %c0_26 = arith.constant 0 : index
    %c0_27 = arith.constant 0 : index
    %c0_28 = arith.constant 0 : index
    %47 = vector.load %arg6[%c0_24, %c0_25, %c0_26, %c0_27, %c0_28] : memref<1x1x5x8x128xf32, #tpu.memory_space<vmem>>, vector<1x1x1x8x128xf32>
    %48 = vector.shape_cast %47 : vector<1x1x1x8x128xf32> to vector<8x128xf32>
    %49 = vector.shape_cast %46 : vector<8x128xf32> to vector<1x1x1x8x128xf32>
    tpu.vector_store %arg6[%c0_24, %c0_25, %c0_26, %c0_27, %c0_28], %49 {strides = array<i32>} : memref<1x1x5x8x128xf32, #tpu.memory_space<vmem>>, vector<1x1x1x8x128xf32>,
    %c0_29 = arith.constant 0 : index
    %c0_30 = arith.constant 0 : index
    %c1 = arith.constant 1 : index
    %c0_31 = arith.constant 0 : index
    %c0_32 = arith.constant 0 : index
    %50 = vector.load %arg6[%c0_29, %c0_30, %c1, %c0_31, %c0_32] : memref<1x1x5x8x128xf32, #tpu.memory_space<vmem>>, vector<1x1x1x8x128xf32>
    %51 = vector.shape_cast %50 : vector<1x1x1x8x128xf32> to vector<8x128xf32>
    %cst_33 = arith.constant dense<0.000000e+00> : vector<8x128xf32>
    %52 = tpu.matmul %17, %12, %cst_33 {dimension_numbers = #tpu.dot_dimension_numbers<[1], [0], [0], [1], [0, 0, 1, 1], [], []>} : vector<8x8xf32>, vector<8x128xf32>, vector<8x128xf32> -> vector<8x128xf32>
    %53 = arith.addf %51, %52 : vector<8x128xf32>
    %c0_34 = arith.constant 0 : index
    %c0_35 = arith.constant 0 : index
    %c1_36 = arith.constant 1 : index
    %c0_37 = arith.constant 0 : index
    %c0_38 = arith.constant 0 : index
    %54 = vector.load %arg6[%c0_34, %c0_35, %c1_36, %c0_37, %c0_38] : memref<1x1x5x8x128xf32, #tpu.memory_space<vmem>>, vector<1x1x1x8x128xf32>
    %55 = vector.shape_cast %54 : vector<1x1x1x8x128xf32> to vector<8x128xf32>
    %56 = vector.shape_cast %53 : vector<8x128xf32> to vector<1x1x1x8x128xf32>
    tpu.vector_store %arg6[%c0_34, %c0_35, %c1_36, %c0_37, %c0_38], %56 {strides = array<i32>} : memref<1x1x5x8x128xf32, #tpu.memory_space<vmem>>, vector<1x1x1x8x128xf32>,
    %c0_39 = arith.constant 0 : index
    %c0_40 = arith.constant 0 : index
    %c2 = arith.constant 2 : index
    %c0_41 = arith.constant 0 : index
    %c0_42 = arith.constant 0 : index
    %57 = vector.load %arg6[%c0_39, %c0_40, %c2, %c0_41, %c0_42] : memref<1x1x5x8x128xf32, #tpu.memory_space<vmem>>, vector<1x1x1x8x128xf32>
    %58 = vector.shape_cast %57 : vector<1x1x1x8x128xf32> to vector<8x128xf32>
    %cst_43 = arith.constant dense<0.000000e+00> : vector<8x128xf32>
    %59 = tpu.matmul %17, %6, %cst_43 {dimension_numbers = #tpu.dot_dimension_numbers<[1], [0], [0], [1], [0, 0, 1, 1], [], []>} : vector<8x8xf32>, vector<8x128xf32>, vector<8x128xf32> -> vector<8x128xf32>
    %60 = arith.addf %58, %59 : vector<8x128xf32>
    %c0_44 = arith.constant 0 : index
    %c0_45 = arith.constant 0 : index
    %c2_46 = arith.constant 2 : index
    %c0_47 = arith.constant 0 : index
    %c0_48 = arith.constant 0 : index
    %61 = vector.load %arg6[%c0_44, %c0_45, %c2_46, %c0_47, %c0_48] : memref<1x1x5x8x128xf32, #tpu.memory_space<vmem>>, vector<1x1x1x8x128xf32>
    %62 = vector.shape_cast %61 : vector<1x1x1x8x128xf32> to vector<8x128xf32>
    %63 = vector.shape_cast %60 : vector<8x128xf32> to vector<1x1x1x8x128xf32>
    tpu.vector_store %arg6[%c0_44, %c0_45, %c2_46, %c0_47, %c0_48], %63 {strides = array<i32>} : memref<1x1x5x8x128xf32, #tpu.memory_space<vmem>>, vector<1x1x1x8x128xf32>,
    %c0_49 = arith.constant 0 : index
    %c0_50 = arith.constant 0 : index
    %c3 = arith.constant 3 : index
    %c0_51 = arith.constant 0 : index
    %c0_52 = arith.constant 0 : index
    %64 = vector.load %arg6[%c0_49, %c0_50, %c3, %c0_51, %c0_52] : memref<1x1x5x8x128xf32, #tpu.memory_space<vmem>>, vector<1x1x1x8x128xf32>
    %65 = vector.shape_cast %64 : vector<1x1x1x8x128xf32> to vector<8x128xf32>
    %cst_53 = arith.constant dense<0.000000e+00> : vector<8x128xf32>
    %66 = tpu.matmul %17, %40, %cst_53 {dimension_numbers = #tpu.dot_dimension_numbers<[1], [0], [0], [1], [0, 0, 1, 1], [], []>} : vector<8x8xf32>, vector<8x128xf32>, vector<8x128xf32> -> vector<8x128xf32>
    %67 = arith.addf %65, %66 : vector<8x128xf32>
    %c0_54 = arith.constant 0 : index
    %c0_55 = arith.constant 0 : index
    %c3_56 = arith.constant 3 : index
    %c0_57 = arith.constant 0 : index
    %c0_58 = arith.constant 0 : index
    %68 = vector.load %arg6[%c0_54, %c0_55, %c3_56, %c0_57, %c0_58] : memref<1x1x5x8x128xf32, #tpu.memory_space<vmem>>, vector<1x1x1x8x128xf32>
    %69 = vector.shape_cast %68 : vector<1x1x1x8x128xf32> to vector<8x128xf32>
    %70 = vector.shape_cast %67 : vector<8x128xf32> to vector<1x1x1x8x128xf32>
    tpu.vector_store %arg6[%c0_54, %c0_55, %c3_56, %c0_57, %c0_58], %70 {strides = array<i32>} : memref<1x1x5x8x128xf32, #tpu.memory_space<vmem>>, vector<1x1x1x8x128xf32>,
    %c0_59 = arith.constant 0 : index
    %c0_60 = arith.constant 0 : index
    %c4 = arith.constant 4 : index
    %c0_61 = arith.constant 0 : index
    %c0_62 = arith.constant 0 : index
    %71 = vector.load %arg6[%c0_59, %c0_60, %c4, %c0_61, %c0_62] : memref<1x1x5x8x128xf32, #tpu.memory_space<vmem>>, vector<1x1x1x8x128xf32>
    %72 = vector.shape_cast %71 : vector<1x1x1x8x128xf32> to vector<8x128xf32>
    %cst_63 = arith.constant dense<0.000000e+00> : vector<8x128xf32>
    %73 = tpu.matmul %17, %42, %cst_63 {dimension_numbers = #tpu.dot_dimension_numbers<[1], [0], [0], [1], [0, 0, 1, 1], [], []>} : vector<8x8xf32>, vector<8x128xf32>, vector<8x128xf32> -> vector<8x128xf32>
    %74 = arith.addf %72, %73 : vector<8x128xf32>
    %c0_64 = arith.constant 0 : index
    %c0_65 = arith.constant 0 : index
    %c4_66 = arith.constant 4 : index
    %c0_67 = arith.constant 0 : index
    %c0_68 = arith.constant 0 : index
    %75 = vector.load %arg6[%c0_64, %c0_65, %c4_66, %c0_67, %c0_68] : memref<1x1x5x8x128xf32, #tpu.memory_space<vmem>>, vector<1x1x1x8x128xf32>
    %76 = vector.shape_cast %75 : vector<1x1x1x8x128xf32> to vector<8x128xf32>
    %77 = vector.shape_cast %74 : vector<8x128xf32> to vector<1x1x1x8x128xf32>
    tpu.vector_store %arg6[%c0_64, %c0_65, %c4_66, %c0_67, %c0_68], %77 {strides = array<i32>} : memref<1x1x5x8x128xf32, #tpu.memory_space<vmem>>, vector<1x1x1x8x128xf32>,
    return
  }
  func.func @transform_0(%arg0: i32, %arg1: i32, %arg2: i32, %arg3: memref<4xi32, #tpu.memory_space<smem>>) -> (i32, i32, i32, i32) {
    %0 = arith.index_cast %arg0 : i32 to index
    %1 = memref.load %arg3[%0] : memref<4xi32, #tpu.memory_space<smem>>
    %c0_i32 = arith.constant 0 : i32
    %c0_i32_0 = arith.constant 0 : i32
    return %arg1, %1, %arg2, %c0_i32 : i32, i32, i32, i32
  }
  func.func @transform_1(%arg0: i32, %arg1: i32, %arg2: i32, %arg3: memref<4xi32, #tpu.memory_space<smem>>) -> (i32, i32, i32, i32) {
    %0 = arith.index_cast %arg0 : i32 to index
    %1 = memref.load %arg3[%0] : memref<4xi32, #tpu.memory_space<smem>>
    %c0_i32 = arith.constant 0 : i32
    %c0_i32_0 = arith.constant 0 : i32
    return %arg1, %1, %arg2, %c0_i32 : i32, i32, i32, i32
  }
  func.func @transform_2(%arg0: i32, %arg1: i32, %arg2: i32, %arg3: memref<4xi32, #tpu.memory_space<smem>>) -> (i32, i32, i32, i32, i32) {
    %c0_i32 = arith.constant 0 : i32
    %c0_i32_0 = arith.constant 0 : i32
    %c0_i32_1 = arith.constant 0 : i32
    %c0_i32_2 = arith.constant 0 : i32
    return %arg0, %arg1, %c0_i32, %c0_i32_0, %c0_i32_1 : i32, i32, i32, i32, i32
  }
}

</mosaic_0001>

<llo_original>
// kernel: tpu_custom_call.1
$region0: #{tpu_custom_call.1}
  #allocation0 [shape = 'u32[]', space=smem, size = 0x4, offset = 0x4, fixed_abs, tag = 'smem constant byte address 0x4 - core index']
  #allocation1 [shape = 'u32[144,128]{1,0:T(1,128)}', space=vmem, size = 0x12000, scoped, tag = 'internal scratch']
  #allocation2 [shape = 's32[1]{0}', space=sflag, size = 0x4, scoped, tag = 'scoped memory for tpu_custom_call.1']
  #allocation3 [shape = 'u8[512]{0}', space=smem, size = 0x200, scoped, tag = 'prefetched SMEM operand 0']
  %s0 = inlined_call_operand.hbm [shape: s32[4], index: 0, kind: input, shape index: {}]
  %s1 = inlined_call_operand.hbm [shape: f32[2,6,8,128], index: 1, kind: input, shape index: {}]
  %s2 = inlined_call_operand.hbm [shape: f32[2,6,8,128], index: 2, kind: input, shape index: {}]
  %s3 = inlined_call_operand.hbm [shape: f32[4,2,5,8,128], index: 3, kind: output, shape index: {}]
  %s4 = sld [smem:[#allocation0]]
  $region53: #{tpu_custom_call.1} parent=0
    _
  %s6 = ssub.s32 1, %s4
  %s7 = scalar_select 0, %s6, %s4
  %9 = dma.hbm_to_smem %s0, 16, [#allocation3], [#allocation2]
  %10 = dma.done [#allocation2], 16
  %11 = sfence
  $region1: #{tpu_custom_call.1} parent=0
    #allocation4 [shape = 'u8[8192]{0}', space=vmem, size = 0x2000, scoped, tag = 'input window, operand 1']
    #allocation5 [shape = 's32[2]{0}', space=sflag, size = 0x8, scoped, tag = 'scoped memory for tpu_custom_call.1']
    #allocation6 [shape = 's32[2]{0}', space=sflag, size = 0x8, scoped, tag = 'scoped memory for tpu_custom_call.1']
    #allocation7 [shape = 'u8[8192]{0}', space=vmem, size = 0x2000, scoped, tag = 'input window, operand 2']
    #allocation8 [shape = 's32[2]{0}', space=sflag, size = 0x8, scoped, tag = 'scoped memory for tpu_custom_call.1']
    #allocation9 [shape = 'u8[40960]{0}', space=vmem, size = 0xa000, scoped, tag = 'output window, operand 0']
    %12 = vsyncpa [#allocation5], 0
    %s13 = scalar_lea.sflag [#allocation5], 1
    %14 = vsyncpa %s13, 0
    %15 = vsyncpa [#allocation8], 0
    %s16 = scalar_lea.sflag [#allocation8], 1
    %17 = vsyncpa %s16, 0
    %18 = vsyncpa [#allocation6], 0
    %s19 = scalar_lea.sflag [#allocation6], 1
    %20 = vsyncpa %s19, 0
    loop: start=0, step=1, limit=10
    $region2: #{tpu_custom_call.1} parent=1 // loop_pre_header
      _
    $region3: #{tpu_custom_call.1} parent=1 // loop_header
      %s22 = sphi 0, %s26
      %p23 = scmp.ge.s32.totalorder %s22, 10
      %s29 = sphi 0, %s48
      %s30 = sphi 0, %s44
      %s31 = sphi 0, %s40
      %s32 = sphi 0, %s29
      %s33 = sphi 0, %s30
      %s34 = sphi 0, %s31
      %s35 = sphi 0, %s32
      %s36 = sphi 0, %s33
      %s37 = sphi 0, %s34
      %s57 = sphi 0, %s59
      %s60 = sphi 0, %s57
      %s61 = sphi 0, %s60
      %s77 = sphi 0, %s61
      %s89 = sphi 0, %s91
      %s92 = sphi 0, %s89
      %s93 = sphi 0, %s92
      %s109 = sphi 0, %s93
      %s117 = sphi 0, %s119
      %s120 = sphi 0, %s117
      %s121 = sphi 0, %s120
      %s137 = sphi 0, %s121
    $region4: #{tpu_custom_call.1} parent=1 // loop_header_branch
      %25 = sbr.rel (%p23) target = $region8
    $region5: #{tpu_custom_call.1} parent=1 // loop_body
      %s27 = ssub.s32 %s22, 1
      %s28 = ssub.s32 %s22, 2
      %s38 = sadd.s32 1, %s31
      %p39 = scmp.ge.s32.totalorder %s38, 1
      %s40 = scalar_select %p39, 0, %s38
      %s41 = sadd.s32 1, %s30
      %s42 = scalar_select %p39, %s41, %s30
      %p43 = scmp.ge.s32.totalorder %s42, 2
      %s44 = scalar_select %p43, 0, %s42
      %s45 = sadd.s32 1, %s29
      %s46 = scalar_select %p43, %s45, %s29
      %p47 = scmp.ge.s32.totalorder %s46, 4
      %s48 = scalar_select %p47, 0, %s46
      %s49 = sld [smem:[#allocation3 + %s29]]
      %s50 = sld [smem:[#allocation3 + %s48]]
      %s51 = ssub.s32 %s30, %s44
      %s52 = ssub.s32 %s49, %s50
      %s53 = sor.u32 %s51, %s52
      %s54 = ssub.s32 %s31, %s40
      %s55 = sor.u32 %s53, %s54
      %p56 = scmp.eq.s32.totalorder %s55, 0
      %s58 = sadd.s32 %s57, 1
      %s59 = scalar_select %p56, %s57, %s58
      %p62 = pneg %p56
      %p63 = scmp.eq.s32.totalorder %s22, 7
      %p64 = por %p62, %p63
      %p65 = scmp.ne.s32.totalorder %s57, %s60
      %p66 = scmp.eq.s32.totalorder %s22, 0
      %p67 = por %p65, %p66
      %p68 = scmp.ne.s32.totalorder %s57, %s60
      %p69 = scmp.eq.s32.totalorder %s27, 7
      %p70 = por %p68, %p69
      %p71 = scmp.ne.s32.totalorder %s60, %s61
      %p72 = scmp.eq.s32.totalorder %s27, 0
      %p73 = por %p71, %p72
      %p74 = scmp.ne.s32.totalorder %s60, %s61
      %p75 = scmp.eq.s32.totalorder %s28, 7
      %p76 = por %p74, %p75
      %p78 = scmp.ne.s32.totalorder %s61, %s77
      %p79 = scmp.eq.s32.totalorder %s28, 0
      %p80 = por %p78, %p79
      %s81 = sld [smem:[#allocation3 + %s29]]
      %s82 = sld [smem:[#allocation3 + %s48]]
      %s83 = ssub.s32 %s30, %s44
      %s84 = ssub.s32 %s81, %s82
      %s85 = sor.u32 %s83, %s84
      %s86 = ssub.s32 %s31, %s40
      %s87 = sor.u32 %s85, %s86
      %p88 = scmp.eq.s32.totalorder %s87, 0
      %s90 = sadd.s32 %s89, 1
      %s91 = scalar_select %p88, %s89, %s90
      %p94 = pneg %p88
      %p95 = scmp.eq.s32.totalorder %s22, 7
      %p96 = por %p94, %p95
      %p97 = scmp.ne.s32.totalorder %s89, %s92
      %p98 = scmp.eq.s32.totalorder %s22, 0
      %p99 = por %p97, %p98
      %p100 = scmp.ne.s32.totalorder %s89, %s92
      %p101 = scmp.eq.s32.totalorder %s27, 7
      %p102 = por %p100, %p101
      %p103 = scmp.ne.s32.totalorder %s92, %s93
      %p104 = scmp.eq.s32.totalorder %s27, 0
      %p105 = por %p103, %p104
      %p106 = scmp.ne.s32.totalorder %s92, %s93
      %p107 = scmp.eq.s32.totalorder %s28, 7
      %p108 = por %p106, %p107
      %p110 = scmp.ne.s32.totalorder %s93, %s109
      %p111 = scmp.eq.s32.totalorder %s28, 0
      %p112 = por %p110, %p111
      %s113 = ssub.s32 %s29, %s48
      %s114 = ssub.s32 %s30, %s44
      %s115 = sor.u32 %s113, %s114
      %p116 = scmp.eq.s32.totalorder %s115, 0
      %s118 = sadd.s32 %s117, 1
      %s119 = scalar_select %p116, %s117, %s118
      %p122 = pneg %p116
      %p123 = scmp.eq.s32.totalorder %s22, 7
      %p124 = por %p122, %p123
      %p125 = scmp.ne.s32.totalorder %s117, %s120
      %p126 = scmp.eq.s32.totalorder %s22, 0
      %p127 = por %p125, %p126
      %p128 = scmp.ne.s32.totalorder %s117, %s120
      %p129 = scmp.eq.s32.totalorder %s27, 7
      %p130 = por %p128, %p129
      %p131 = scmp.ne.s32.totalorder %s120, %s121
      %p132 = scmp.eq.s32.totalorder %s27, 0
      %p133 = por %p131, %p132
      %p134 = scmp.ne.s32.totalorder %s120, %s121
      %p135 = scmp.eq.s32.totalorder %s28, 7
      %p136 = por %p134, %p135
      %p138 = scmp.ne.s32.totalorder %s121, %s137
      %p139 = scmp.eq.s32.totalorder %s28, 0
      %p140 = por %p138, %p139
      %p141 = scmp.le.s32.totalorder 1, %s22
      %p142 = scmp.lt.s32.totalorder %s22, 9
      %p143 = pnand %p141, %p142
      %p144 = pneg %p143
      // Predicated region
      $region9: #{tpu_custom_call.1} parent=5 // pred_check
        _
      $region10: #{tpu_custom_call.1} parent=5 // pred_check_branch
        %146 = sbr.rel (%p143) target = $region12
      $region11: #{tpu_custom_call.1} parent=5 // pred_region
        %s147 = ssub.s32 %s22, 1
      $region12: #{tpu_custom_call.1} parent=5 // pred_fallthru
        _
      %p148 = scmp.lt.s32.totalorder %s22, 8
      // Predicated region
      $region13: #{tpu_custom_call.1} parent=5 // pred_check
        %p149 = pneg %p148
      $region14: #{tpu_custom_call.1} parent=5 // pred_check_branch
        %151 = sbr.rel (%p149) target = $region16
      $region15: #{tpu_custom_call.1} parent=5 // pred_region
        // Predicated region
        $region17: #{tpu_custom_call.1} parent=15 // pred_check
          %p152 = pneg %p67
        $region18: #{tpu_custom_call.1} parent=15 // pred_check_branch
          %154 = sbr.rel (%p152) target = $region20
        $region19: #{tpu_custom_call.1} parent=15 // pred_region
          %s155 = sand.u32 %s57, 1
          %s156 = scalar_lea.sflag [#allocation5], %s155
          %s157 = sand.u32 %s57, 1
          %s158 = smul.addr %s157, 8
          %s159 = scalar_lea.vmem [#allocation4], %s158
          %s160 = sld [smem:[#allocation3 + %s29]]
          %s162 = ssub.s32 128, 128
          %163 = vsyncadd %s156, %s162
          %s164 = sadd.s32 %s31, %s160
          %s165 = smul.addr %s30, 6
          %s166 = sadd.s32 %s164, %s165
          %s167 = smul.addr %s166, 128
          %s168 = scalar_lea.hbm %s1, %s167
          %s170 = sshll.u32 %s159, 4
          %s171 = int_to_ptr.vmem [resolvable:$true] %s170
          %173 = dma.hbm_to_vmem [thread:$0]  %s168, 128, %s171, %s156
        $region20: #{tpu_custom_call.1} parent=15 // pred_fallthru
          _
        // Predicated region
        $region21: #{tpu_custom_call.1} parent=15 // pred_check
          %p174 = pneg %p99
        $region22: #{tpu_custom_call.1} parent=15 // pred_check_branch
          %176 = sbr.rel (%p174) target = $region24
        $region23: #{tpu_custom_call.1} parent=15 // pred_region
          %s177 = sand.u32 %s89, 1
          %s178 = scalar_lea.sflag [#allocation8], %s177
          %s179 = sand.u32 %s89, 1
          %s180 = smul.addr %s179, 8
          %s181 = scalar_lea.vmem [#allocation7], %s180
          %s182 = sld [smem:[#allocation3 + %s29]]
          %s184 = ssub.s32 128, 128
          %185 = vsyncadd %s178, %s184
          %s186 = sadd.s32 %s31, %s182
          %s187 = smul.addr %s30, 6
          %s188 = sadd.s32 %s186, %s187
          %s189 = smul.addr %s188, 128
          %s190 = scalar_lea.hbm %s2, %s189
          %s192 = sshll.u32 %s181, 4
          %s193 = int_to_ptr.vmem [resolvable:$true] %s192
          %195 = dma.hbm_to_vmem [thread:$0]  %s190, 128, %s193, %s178
        $region24: #{tpu_custom_call.1} parent=15 // pred_fallthru
          _
      $region16: #{tpu_custom_call.1} parent=5 // pred_fallthru
        _
      %p196 = scmp.le.s32.totalorder 1, %s22
      %p197 = scmp.lt.s32.totalorder %s22, 9
      %p198 = pnand %p196, %p197
      %p199 = pneg %p198
      // Predicated region
      $region25: #{tpu_custom_call.1} parent=5 // pred_check
        _
      $region26: #{tpu_custom_call.1} parent=5 // pred_check_branch
        %201 = sbr.rel (%p198) target = $region28
      $region27: #{tpu_custom_call.1} parent=5 // pred_region
        %s202 = ssub.s32 %s22, 1
        %s203 = sand.u32 %s60, 1
        %s204 = scalar_lea.sflag [#allocation5], %s203
        %s205 = sand.u32 %s60, 1
        %s206 = smul.addr %s205, 8
        %s207 = scalar_lea.vmem [#allocation4], %s206
        // Predicated region
        $region29: #{tpu_custom_call.1} parent=27 // pred_check
          %p208 = pneg %p73
        $region30: #{tpu_custom_call.1} parent=27 // pred_check_branch
          %210 = sbr.rel (%p208) target = $region32
        $region31: #{tpu_custom_call.1} parent=27 // pred_region
          %211 = dma.done %s204, 128
        $region32: #{tpu_custom_call.1} parent=27 // pred_fallthru
          _
        %s212 = sand.u32 %s92, 1
        %s213 = scalar_lea.sflag [#allocation8], %s212
        %s214 = sand.u32 %s92, 1
        %s215 = smul.addr %s214, 8
        %s216 = scalar_lea.vmem [#allocation7], %s215
        // Predicated region
        $region33: #{tpu_custom_call.1} parent=27 // pred_check
          %p217 = pneg %p105
        $region34: #{tpu_custom_call.1} parent=27 // pred_check_branch
          %219 = sbr.rel (%p217) target = $region36
        $region35: #{tpu_custom_call.1} parent=27 // pred_region
          %220 = dma.done %s213, 128
        $region36: #{tpu_custom_call.1} parent=27 // pred_fallthru
          _
        %s221 = sand.u32 %s60, 1
        %s222 = scalar_lea.sflag [#allocation5], %s221
        %s223 = sand.u32 %s60, 1
        %s224 = smul.addr %s223, 8
        %s225 = scalar_lea.vmem [#allocation4], %s224
        %p226 = pneg %p73
        %p227 = pneg %p70
        %s228 = sand.u32 %s92, 1
        %s229 = scalar_lea.sflag [#allocation8], %s228
        %s230 = sand.u32 %s92, 1
        %s231 = smul.addr %s230, 8
        %s232 = scalar_lea.vmem [#allocation7], %s231
        %p233 = pneg %p105
        %p234 = pneg %p102
        %p235 = pneg %p133
        %p236 = pneg %p130
        %s237 = sand.u32 %s120, 1
        %s238 = scalar_lea.sflag [#allocation6], %s237
        %s239 = sand.u32 %s120, 1
        %s240 = smul.addr %s239, 40
        %s241 = scalar_lea.vmem [#allocation9], %s240
        %s242 = sld [smem:[#allocation3 + %s32]]
        %s243 = sld [smem:[#allocation3 + %s32]]
        %p244 = scmp.eq.s32.totalorder %s34, 0
        // Predicated region
        $region37: #{tpu_custom_call.1} parent=27 // pred_check
          %p245 = pneg %p244
        $region38: #{tpu_custom_call.1} parent=27 // pred_check_branch
          %247 = sbr.rel (%p245) target = $region40
        $region39: #{tpu_custom_call.1} parent=27 // pred_region
          %248 = vst [vmem:[%s241] sm:$0xff] 0.0
          %249 = vst [vmem:[%s241 + $0x8] sm:$0xff] 0.0
          %250 = vst [vmem:[%s241 + $0x10] sm:$0xff] 0.0
          %251 = vst [vmem:[%s241 + $0x18] sm:$0xff] 0.0
          %252 = vst [vmem:[%s241 + $0x20] sm:$0xff] 0.0
        $region40: #{tpu_custom_call.1} parent=27 // pred_fallthru
          _
        %v253 = vld [vmem:[%s207] sm:$0xff]
        %v254 = vld [vmem:[%s216] sm:$0xff]
        %v255 = vsub.f32 0.0, %v253
        %v256 = vmul.f32 %v255, 1.442695
        %v257 = vpow.pop %v256
        %v258 = vadd.f32 %v257, 1.0
        %v259 = vrcp.pop %v258
        %v260 = vlaneseq
        %v261 = vshrl.u32 %v260, 7
        %vm262 = vcmp.eq.s32.totalorder %v261, 0
        %v263 = vsel %vm262, 1, 0
        %v264 = vcvt.s32.f32 %v263
        %vm265 = vcmp.ne.f32.partialorder %v254, 255.0
        %v266 = vmul.f32 %v259, %v254
        %v267 = vsub.f32 1.0, %v254
        %v268 = vsub.f32 1.0, %v259
        %v269 = vmul.f32 %v267, %v268
        %v270 = vadd.f32 %v269, %v266
        %v271 = vmax.f32 %v270, 1e-08
        %v272 = vmin.f32 %v271, 1.0
        %v273 = vsub.f32 1.0, %v272
        %v274 = vmul.f32 %v273, %v273
        %v275 = vsub.f32 0.0, %v274
        %v276 = vlog2.pop %v272
        %v277 = vmul.f32 %v276, 0.6931472
        %v278 = vmul.f32 %v275, %v277
        %v279 = vsel %vm265, %v278, 0.0
        %v280 = vsel %vm265, 1, 0
        %v281 = vcvt.s32.f32 %v280
        %v282 = vld [vmem:[%s241] sm:$0xff]
        %vm283 = vcmask 64512
        %v285 = vsel %vm283, %v264, 0
        %287 = vmatprep.subr.mxu0 0.0
        %288 = vmatpush1.msra.mxu0 0.0
        %289 = vmatprep.subr.mxu0 0.0
        %290 = vmatpush1.msra.mxu0 0.0
        %291 = vmatprep.subr.mxu0 0.0
        %292 = vmatpush1.msra.mxu0 0.0
        %293 = vmatprep.subr.mxu0 0.0
        %294 = vmatpush1.msra.mxu0 0.0
        %295 = vmatprep.subr.mxu0 0.0
        %296 = vmatpush1.msra.mxu0 0.0
        %297 = vmatprep.subr.mxu0 0.0
        %298 = vmatpush1.msra.mxu0 0.0
        %299 = vmatprep.subr.mxu0 0.0
        %300 = vmatpush1.msra.mxu0 0.0
        %301 = vmatprep.subr.mxu0 0.0
        %302 = vmatpush1.msra.mxu0 0.0
        %303 = vmatprep.subr.mxu0 0.0
        %304 = vmatpush1.msra.mxu0 0.0
        %305 = vmatprep.subr.mxu0 0.0
        %306 = vmatpush1.msra.mxu0 0.0
        %307 = vmatprep.subr.mxu0 0.0
        %308 = vmatpush1.msra.mxu0 0.0
        %309 = vmatprep.subr.mxu0 0.0
        %310 = vmatpush1.msra.mxu0 0.0
        %311 = vmatprep.subr.mxu0 0.0
        %312 = vmatpush1.msra.mxu0 0.0
        %313 = vmatprep.subr.mxu0 0.0
        %314 = vmatpush1.msra.mxu0 0.0
        %315 = vmatprep.subr.mxu0 0.0
        %316 = vmatpush1.msra.mxu0 0.0
        %317 = vmatprep.subr.mxu0 0.0
        %318 = vmatpush1.msra.mxu0 %v266
        %319 = vmatprep.subr.mxu0 0.0
        %320 = vmatpush2.msra.mxu0 0.0
        %321 = vmatprep.subr.mxu0 0.0
        %322 = vmatpush2.msra.mxu0 0.0
        %323 = vmatprep.subr.mxu0 0.0
        %324 = vmatpush2.msra.mxu0 0.0
        %325 = vmatprep.subr.mxu0 0.0
        %326 = vmatpush2.msra.mxu0 0.0
        %327 = vmatprep.subr.mxu0 0.0
        %328 = vmatpush2.msra.mxu0 0.0
        %329 = vmatprep.subr.mxu0 0.0
        %330 = vmatpush2.msra.mxu0 0.0
        %331 = vmatprep.subr.mxu0 0.0
        %332 = vmatpush2.msra.mxu0 0.0
        %333 = vmatprep.subr.mxu0 0.0
        %334 = vmatpush2.msra.mxu0 0.0
        %335 = vmatprep.subr.mxu0 0.0
        %336 = vmatpush2.msra.mxu0 0.0
        %337 = vmatprep.subr.mxu0 0.0
        %338 = vmatpush2.msra.mxu0 0.0
        %339 = vmatprep.subr.mxu0 0.0
        %340 = vmatpush2.msra.mxu0 0.0
        %341 = vmatprep.subr.mxu0 0.0
        %342 = vmatpush2.msra.mxu0 0.0
        %343 = vmatprep.subr.mxu0 0.0
        %344 = vmatpush2.msra.mxu0 0.0
        %345 = vmatprep.subr.mxu0 0.0
        %346 = vmatpush2.msra.mxu0 0.0
        %347 = vmatprep.subr.mxu0 0.0
        %348 = vmatpush2.msra.mxu0 0.0
        %349 = vmatprep.subr.mxu0 0.0
        %350 = vmatpush2.msra.mxu0 0.0
        %351 = vmatprep.mubr.f32.mxu0 0.0
        %352 = vmatmul.mubr.f32.gmra.mxu0 %v285
        %v353 = vpop.f32.mrf.mxu0
        %v354 = vadd.f32 0.0, %v353
        %v355 = vpop.f32.mrf.mxu0
        %356 = vdwg.mxu0
        %v357 = vadd.f32 %v282, %v354
        %358 = vst [vmem:[%s241] sm:$0xff] %v357
        %s359 = scalar_lea.vmem %s241, 8 [#allocation9]
        %v360 = vld [vmem:[%s359] sm:$0xff]
        %361 = vmatprep.subr.mxu0 0.0
        %362 = vmatpush1.msra.mxu0 0.0
        %363 = vmatprep.subr.mxu0 0.0
        %364 = vmatpush1.msra.mxu0 0.0
        %365 = vmatprep.subr.mxu0 0.0
        %366 = vmatpush1.msra.mxu0 0.0
        %367 = vmatprep.subr.mxu0 0.0
        %368 = vmatpush1.msra.mxu0 0.0
        %369 = vmatprep.subr.mxu0 0.0
        %370 = vmatpush1.msra.mxu0 0.0
        %371 = vmatprep.subr.mxu0 0.0
        %372 = vmatpush1.msra.mxu0 0.0
        %373 = vmatprep.subr.mxu0 0.0
        %374 = vmatpush1.msra.mxu0 0.0
        %375 = vmatprep.subr.mxu0 0.0
        %376 = vmatpush1.msra.mxu0 0.0
        %377 = vmatprep.subr.mxu0 0.0
        %378 = vmatpush1.msra.mxu0 0.0
        %379 = vmatprep.subr.mxu0 0.0
        %380 = vmatpush1.msra.mxu0 0.0
        %381 = vmatprep.subr.mxu0 0.0
        %382 = vmatpush1.msra.mxu0 0.0
        %383 = vmatprep.subr.mxu0 0.0
        %384 = vmatpush1.msra.mxu0 0.0
        %385 = vmatprep.subr.mxu0 0.0
        %386 = vmatpush1.msra.mxu0 0.0
        %387 = vmatprep.subr.mxu0 0.0
        %388 = vmatpush1.msra.mxu0 0.0
        %389 = vmatprep.subr.mxu0 0.0
        %390 = vmatpush1.msra.mxu0 0.0
        %391 = vmatprep.subr.mxu0 0.0
        %392 = vmatpush1.msra.mxu0 %v259
        %393 = vmatprep.subr.mxu0 0.0
        %394 = vmatpush2.msra.mxu0 0.0
        %395 = vmatprep.subr.mxu0 0.0
        %396 = vmatpush2.msra.mxu0 0.0
        %397 = vmatprep.subr.mxu0 0.0
        %398 = vmatpush2.msra.mxu0 0.0
        %399 = vmatprep.subr.mxu0 0.0
        %400 = vmatpush2.msra.mxu0 0.0
        %401 = vmatprep.subr.mxu0 0.0
        %402 = vmatpush2.msra.mxu0 0.0
        %403 = vmatprep.subr.mxu0 0.0
        %404 = vmatpush2.msra.mxu0 0.0
        %405 = vmatprep.subr.mxu0 0.0
        %406 = vmatpush2.msra.mxu0 0.0
        %407 = vmatprep.subr.mxu0 0.0
        %408 = vmatpush2.msra.mxu0 0.0
        %409 = vmatprep.subr.mxu0 0.0
        %410 = vmatpush2.msra.mxu0 0.0
        %411 = vmatprep.subr.mxu0 0.0
        %412 = vmatpush2.msra.mxu0 0.0
        %413 = vmatprep.subr.mxu0 0.0
        %414 = vmatpush2.msra.mxu0 0.0
        %415 = vmatprep.subr.mxu0 0.0
        %416 = vmatpush2.msra.mxu0 0.0
        %417 = vmatprep.subr.mxu0 0.0
        %418 = vmatpush2.msra.mxu0 0.0
        %419 = vmatprep.subr.mxu0 0.0
        %420 = vmatpush2.msra.mxu0 0.0
        %421 = vmatprep.subr.mxu0 0.0
        %422 = vmatpush2.msra.mxu0 0.0
        %423 = vmatprep.subr.mxu0 0.0
        %424 = vmatpush2.msra.mxu0 0.0
        %425 = vmatprep.mubr.f32.mxu0 0.0
        %426 = vmatmul.mubr.f32.gmra.mxu0 %v285
        %v427 = vpop.f32.mrf.mxu0
        %v428 = vadd.f32 0.0, %v427
        %v429 = vpop.f32.mrf.mxu0
        %430 = vdwg.mxu0
        %v431 = vadd.f32 %v360, %v428
        %432 = vst [vmem:[%s359] sm:$0xff] %v431
        %s433 = scalar_lea.vmem %s241, 16 [#allocation9]
        %v434 = vld [vmem:[%s433] sm:$0xff]
        %435 = vmatprep.subr.mxu0 0.0
        %436 = vmatpush1.msra.mxu0 0.0
        %437 = vmatprep.subr.mxu0 0.0
        %438 = vmatpush1.msra.mxu0 0.0
        %439 = vmatprep.subr.mxu0 0.0
        %440 = vmatpush1.msra.mxu0 0.0
        %441 = vmatprep.subr.mxu0 0.0
        %442 = vmatpush1.msra.mxu0 0.0
        %443 = vmatprep.subr.mxu0 0.0
        %444 = vmatpush1.msra.mxu0 0.0
        %445 = vmatprep.subr.mxu0 0.0
        %446 = vmatpush1.msra.mxu0 0.0
        %447 = vmatprep.subr.mxu0 0.0
        %448 = vmatpush1.msra.mxu0 0.0
        %449 = vmatprep.subr.mxu0 0.0
        %450 = vmatpush1.msra.mxu0 0.0
        %451 = vmatprep.subr.mxu0 0.0
        %452 = vmatpush1.msra.mxu0 0.0
        %453 = vmatprep.subr.mxu0 0.0
        %454 = vmatpush1.msra.mxu0 0.0
        %455 = vmatprep.subr.mxu0 0.0
        %456 = vmatpush1.msra.mxu0 0.0
        %457 = vmatprep.subr.mxu0 0.0
        %458 = vmatpush1.msra.mxu0 0.0
        %459 = vmatprep.subr.mxu0 0.0
        %460 = vmatpush1.msra.mxu0 0.0
        %461 = vmatprep.subr.mxu0 0.0
        %462 = vmatpush1.msra.mxu0 0.0
        %463 = vmatprep.subr.mxu0 0.0
        %464 = vmatpush1.msra.mxu0 0.0
        %465 = vmatprep.subr.mxu0 0.0
        %466 = vmatpush1.msra.mxu0 %v254
        %467 = vmatprep.subr.mxu0 0.0
        %468 = vmatpush2.msra.mxu0 0.0
        %469 = vmatprep.subr.mxu0 0.0
        %470 = vmatpush2.msra.mxu0 0.0
        %471 = vmatprep.subr.mxu0 0.0
        %472 = vmatpush2.msra.mxu0 0.0
        %473 = vmatprep.subr.mxu0 0.0
        %474 = vmatpush2.msra.mxu0 0.0
        %475 = vmatprep.subr.mxu0 0.0
        %476 = vmatpush2.msra.mxu0 0.0
        %477 = vmatprep.subr.mxu0 0.0
        %478 = vmatpush2.msra.mxu0 0.0
        %479 = vmatprep.subr.mxu0 0.0
        %480 = vmatpush2.msra.mxu0 0.0
        %481 = vmatprep.subr.mxu0 0.0
        %482 = vmatpush2.msra.mxu0 0.0
        %483 = vmatprep.subr.mxu0 0.0
        %484 = vmatpush2.msra.mxu0 0.0
        %485 = vmatprep.subr.mxu0 0.0
        %486 = vmatpush2.msra.mxu0 0.0
        %487 = vmatprep.subr.mxu0 0.0
        %488 = vmatpush2.msra.mxu0 0.0
        %489 = vmatprep.subr.mxu0 0.0
        %490 = vmatpush2.msra.mxu0 0.0
        %491 = vmatprep.subr.mxu0 0.0
        %492 = vmatpush2.msra.mxu0 0.0
        %493 = vmatprep.subr.mxu0 0.0
        %494 = vmatpush2.msra.mxu0 0.0
        %495 = vmatprep.subr.mxu0 0.0
        %496 = vmatpush2.msra.mxu0 0.0
        %497 = vmatprep.subr.mxu0 0.0
        %498 = vmatpush2.msra.mxu0 0.0
        %499 = vmatprep.mubr.f32.mxu0 0.0
        %500 = vmatmul.mubr.f32.gmra.mxu0 %v285
        %v501 = vpop.f32.mrf.mxu0
        %v502 = vadd.f32 0.0, %v501
        %v503 = vpop.f32.mrf.mxu0
        %504 = vdwg.mxu0
        %v505 = vadd.f32 %v434, %v502
        %506 = vst [vmem:[%s433] sm:$0xff] %v505
        %s507 = scalar_lea.vmem %s241, 24 [#allocation9]
        %v508 = vld [vmem:[%s507] sm:$0xff]
        %509 = vmatprep.subr.mxu0 0.0
        %510 = vmatpush1.msra.mxu0 0.0
        %511 = vmatprep.subr.mxu0 0.0
        %512 = vmatpush1.msra.mxu0 0.0
        %513 = vmatprep.subr.mxu0 0.0
        %514 = vmatpush1.msra.mxu0 0.0
        %515 = vmatprep.subr.mxu0 0.0
        %516 = vmatpush1.msra.mxu0 0.0
        %517 = vmatprep.subr.mxu0 0.0
        %518 = vmatpush1.msra.mxu0 0.0
        %519 = vmatprep.subr.mxu0 0.0
        %520 = vmatpush1.msra.mxu0 0.0
        %521 = vmatprep.subr.mxu0 0.0
        %522 = vmatpush1.msra.mxu0 0.0
        %523 = vmatprep.subr.mxu0 0.0
        %524 = vmatpush1.msra.mxu0 0.0
        %525 = vmatprep.subr.mxu0 0.0
        %526 = vmatpush1.msra.mxu0 0.0
        %527 = vmatprep.subr.mxu0 0.0
        %528 = vmatpush1.msra.mxu0 0.0
        %529 = vmatprep.subr.mxu0 0.0
        %530 = vmatpush1.msra.mxu0 0.0
        %531 = vmatprep.subr.mxu0 0.0
        %532 = vmatpush1.msra.mxu0 0.0
        %533 = vmatprep.subr.mxu0 0.0
        %534 = vmatpush1.msra.mxu0 0.0
        %535 = vmatprep.subr.mxu0 0.0
        %536 = vmatpush1.msra.mxu0 0.0
        %537 = vmatprep.subr.mxu0 0.0
        %538 = vmatpush1.msra.mxu0 0.0
        %539 = vmatprep.subr.mxu0 0.0
        %540 = vmatpush1.msra.mxu0 %v279
        %541 = vmatprep.subr.mxu0 0.0
        %542 = vmatpush2.msra.mxu0 0.0
        %543 = vmatprep.subr.mxu0 0.0
        %544 = vmatpush2.msra.mxu0 0.0
        %545 = vmatprep.subr.mxu0 0.0
        %546 = vmatpush2.msra.mxu0 0.0
        %547 = vmatprep.subr.mxu0 0.0
        %548 = vmatpush2.msra.mxu0 0.0
        %549 = vmatprep.subr.mxu0 0.0
        %550 = vmatpush2.msra.mxu0 0.0
        %551 = vmatprep.subr.mxu0 0.0
        %552 = vmatpush2.msra.mxu0 0.0
        %553 = vmatprep.subr.mxu0 0.0
        %554 = vmatpush2.msra.mxu0 0.0
        %555 = vmatprep.subr.mxu0 0.0
        %556 = vmatpush2.msra.mxu0 0.0
        %557 = vmatprep.subr.mxu0 0.0
        %558 = vmatpush2.msra.mxu0 0.0
        %559 = vmatprep.subr.mxu0 0.0
        %560 = vmatpush2.msra.mxu0 0.0
        %561 = vmatprep.subr.mxu0 0.0
        %562 = vmatpush2.msra.mxu0 0.0
        %563 = vmatprep.subr.mxu0 0.0
        %564 = vmatpush2.msra.mxu0 0.0
        %565 = vmatprep.subr.mxu0 0.0
        %566 = vmatpush2.msra.mxu0 0.0
        %567 = vmatprep.subr.mxu0 0.0
        %568 = vmatpush2.msra.mxu0 0.0
        %569 = vmatprep.subr.mxu0 0.0
        %570 = vmatpush2.msra.mxu0 0.0
        %571 = vmatprep.subr.mxu0 0.0
        %572 = vmatpush2.msra.mxu0 0.0
        %573 = vmatprep.mubr.f32.mxu0 0.0
        %574 = vmatmul.mubr.f32.gmra.mxu0 %v285
        %v575 = vpop.f32.mrf.mxu0
        %v576 = vadd.f32 0.0, %v575
        %v577 = vpop.f32.mrf.mxu0
        %578 = vdwg.mxu0
        %v579 = vadd.f32 %v508, %v576
        %580 = vst [vmem:[%s507] sm:$0xff] %v579
        %s581 = scalar_lea.vmem %s241, 32 [#allocation9]
        %v582 = vld [vmem:[%s581] sm:$0xff]
        %583 = vmatprep.subr.mxu0 0.0
        %584 = vmatpush1.msra.mxu0 0.0
        %585 = vmatprep.subr.mxu0 0.0
        %586 = vmatpush1.msra.mxu0 0.0
        %587 = vmatprep.subr.mxu0 0.0
        %588 = vmatpush1.msra.mxu0 0.0
        %589 = vmatprep.subr.mxu0 0.0
        %590 = vmatpush1.msra.mxu0 0.0
        %591 = vmatprep.subr.mxu0 0.0
        %592 = vmatpush1.msra.mxu0 0.0
        %593 = vmatprep.subr.mxu0 0.0
        %594 = vmatpush1.msra.mxu0 0.0
        %595 = vmatprep.subr.mxu0 0.0
        %596 = vmatpush1.msra.mxu0 0.0
        %597 = vmatprep.subr.mxu0 0.0
        %598 = vmatpush1.msra.mxu0 0.0
        %599 = vmatprep.subr.mxu0 0.0
        %600 = vmatpush1.msra.mxu0 0.0
        %601 = vmatprep.subr.mxu0 0.0
        %602 = vmatpush1.msra.mxu0 0.0
        %603 = vmatprep.subr.mxu0 0.0
        %604 = vmatpush1.msra.mxu0 0.0
        %605 = vmatprep.subr.mxu0 0.0
        %606 = vmatpush1.msra.mxu0 0.0
        %607 = vmatprep.subr.mxu0 0.0
        %608 = vmatpush1.msra.mxu0 0.0
        %609 = vmatprep.subr.mxu0 0.0
        %610 = vmatpush1.msra.mxu0 0.0
        %611 = vmatprep.subr.mxu0 0.0
        %612 = vmatpush1.msra.mxu0 0.0
        %613 = vmatprep.subr.mxu0 0.0
        %614 = vmatpush1.msra.mxu0 %v281
        %615 = vmatprep.subr.mxu0 0.0
        %616 = vmatpush2.msra.mxu0 0.0
        %617 = vmatprep.subr.mxu0 0.0
        %618 = vmatpush2.msra.mxu0 0.0
        %619 = vmatprep.subr.mxu0 0.0
        %620 = vmatpush2.msra.mxu0 0.0
        %621 = vmatprep.subr.mxu0 0.0
        %622 = vmatpush2.msra.mxu0 0.0
        %623 = vmatprep.subr.mxu0 0.0
        %624 = vmatpush2.msra.mxu0 0.0
        %625 = vmatprep.subr.mxu0 0.0
        %626 = vmatpush2.msra.mxu0 0.0
        %627 = vmatprep.subr.mxu0 0.0
        %628 = vmatpush2.msra.mxu0 0.0
        %629 = vmatprep.subr.mxu0 0.0
        %630 = vmatpush2.msra.mxu0 0.0
        %631 = vmatprep.subr.mxu0 0.0
        %632 = vmatpush2.msra.mxu0 0.0
        %633 = vmatprep.subr.mxu0 0.0
        %634 = vmatpush2.msra.mxu0 0.0
        %635 = vmatprep.subr.mxu0 0.0
        %636 = vmatpush2.msra.mxu0 0.0
        %637 = vmatprep.subr.mxu0 0.0
        %638 = vmatpush2.msra.mxu0 0.0
        %639 = vmatprep.subr.mxu0 0.0
        %640 = vmatpush2.msra.mxu0 0.0
        %641 = vmatprep.subr.mxu0 0.0
        %642 = vmatpush2.msra.mxu0 0.0
        %643 = vmatprep.subr.mxu0 0.0
        %644 = vmatpush2.msra.mxu0 0.0
        %645 = vmatprep.subr.mxu0 0.0
        %646 = vmatpush2.msra.mxu0 0.0
        %647 = vmatprep.mubr.f32.mxu0 0.0
        %648 = vmatmul.mubr.f32.gmra.mxu0 %v285
        %v649 = vpop.f32.mrf.mxu0
        %v650 = vadd.f32 0.0, %v649
        %v651 = vpop.f32.mrf.mxu0
        %652 = vdwg.mxu0
        %v653 = vadd.f32 %v582, %v650
        %654 = vst [vmem:[%s581] sm:$0xff] %v653
        %s655 = sand.u32 %s120, 1
        %s656 = scalar_lea.sflag [#allocation6], %s655
        %s657 = sand.u32 %s120, 1
        %s658 = smul.addr %s657, 40
        %s659 = scalar_lea.vmem [#allocation9], %s658
        // Predicated region
        $region41: #{tpu_custom_call.1} parent=27 // pred_check
          %p660 = pneg %p130
        $region42: #{tpu_custom_call.1} parent=27 // pred_check_branch
          %662 = sbr.rel (%p660) target = $region44
        $region43: #{tpu_custom_call.1} parent=27 // pred_region
          %s664 = ssub.s32 640, 640
          %665 = vsyncadd %s656, %s664
          %s666 = smul.addr %s33, 5
          %s667 = smul.addr %s32, 10
          %s668 = sadd.s32 %s666, %s667
          %s669 = smul.addr %s668, 128
          %s670 = scalar_lea.hbm %s3, %s669
          %s671 = sshll.u32 %s659, 4
          %s672 = int_to_ptr.vmem [resolvable:$true] %s671
          %677 = dma.vmem_to_hbm [thread:$0]  %s672, 640, %s670, %s656, 128, 128, 8
        $region44: #{tpu_custom_call.1} parent=27 // pred_fallthru
          _
      $region28: #{tpu_custom_call.1} parent=5 // pred_fallthru
        _
      %p678 = scmp.le.s32.totalorder 2, %s22
      // Predicated region
      $region45: #{tpu_custom_call.1} parent=5 // pred_check
        %p679 = pneg %p678
      $region46: #{tpu_custom_call.1} parent=5 // pred_check_branch
        %681 = sbr.rel (%p679) target = $region48
      $region47: #{tpu_custom_call.1} parent=5 // pred_region
        %s682 = ssub.s32 %s22, 2
        // Predicated region
        $region49: #{tpu_custom_call.1} parent=47 // pred_check
          %p683 = pneg %p136
        $region50: #{tpu_custom_call.1} parent=47 // pred_check_branch
          %685 = sbr.rel (%p683) target = $region52
        $region51: #{tpu_custom_call.1} parent=47 // pred_region
          %s686 = sand.u32 %s121, 1
          %s687 = scalar_lea.sflag [#allocation6], %s686
          %s688 = sand.u32 %s121, 1
          %s689 = smul.addr %s688, 40
          %s690 = scalar_lea.vmem [#allocation9], %s689
          %691 = dma.done %s687, 640
        $region52: #{tpu_custom_call.1} parent=47 // pred_fallthru
          _
      $region48: #{tpu_custom_call.1} parent=5 // pred_fallthru
        _
    $region6: #{tpu_custom_call.1} parent=1 // loop_footer
      %s26 = sadd.s32 1, %s22
    $region7: #{tpu_custom_call.1} parent=1 // loop_footer_branch
      %21 = sbr.rel target = $region3
    $region8: #{tpu_custom_call.1} parent=1 // loop_exit
      _
    %692 = vsyncpa [#allocation5], 1
    %s693 = scalar_lea.sflag [#allocation5], 1
    %694 = vsyncpa %s693, 1
    %695 = vsyncpa [#allocation8], 1
    %s696 = scalar_lea.sflag [#allocation8], 1
    %697 = vsyncpa %s696, 1
    %698 = vsyncpa [#allocation6], 1
    %s699 = scalar_lea.sflag [#allocation6], 1
    %700 = vsyncpa %s699, 1

</llo_original>
